<compile_context>
chip_gen: v6e
topology: v6e:2x2x1
jax: 0.10.0
libtpu: 0.0.40
codegen_flags: <defaults>
</compile_context>

<pallas_src>
import functools

import numpy as np
import jax
import jax.numpy as jnp
from jax.experimental import pallas as pl
from jax.experimental.pallas import tpu as pltpu


def _pick_tile(n, target):
    """Largest multiple-of-8 divisor of n that is <= target, else n itself."""
    if n <= target:
        return n
    best = None
    for t in range(8, target + 1, 8):
        if n % t == 0:
            best = t
    return best if best is not None else n


def _vmem_capacity_bytes():
    try:
        return int(pltpu.get_tpu_info().vmem_capacity_bytes)
    except Exception:
        return 64 * 1024 * 1024   # conservative fallback: assume v7x-sized VMEM


def _vmem_limit_bytes():
    cap = _vmem_capacity_bytes()
    # 48 MiB on 64 MiB parts (v7x), ~100 MiB on 128 MiB parts (v5e/v6e).
    return int(max(min(cap - (16 << 20), 100 << 20), 32 << 20))


# ----------------------------------------------------------------------------
# Kernel 1: pairwise squared distances (the distance part of knn_points),
#           tiled over the query dimension, lane-dense transposed context.
# ----------------------------------------------------------------------------
def _sqdist_kernel(q_ref, ct_ref, o_ref):
    q = q_ref[0]                     # (TQD, 3) f32 queries
    ct = ct_ref[0]                   # (3, Nc)  f32 context, lane-dense
    acc = None
    for d in range(3):               # direct-difference: matches pytorch3d numerics
        diff = q[:, d:d + 1] - ct[d:d + 1, :]          # (TQD, Nc)
        sq = diff * diff
        acc = sq if acc is None else acc + sq
    o_ref[0] = acc


def pairwise_sqdist(p_query, p_context, *, tqd=None):
    B, Nq, _ = p_query.shape
    _, Nc, _ = p_context.shape
    p_context_t = jnp.transpose(p_context, (0, 2, 1))   # (B, 3, Nc), tiny transpose

    cap = _vmem_capacity_bytes()
    vmem_limit = _vmem_limit_bytes()
    if tqd is None:
        # The double-buffered f32 output block (2 * tqd * Nc * 4 B) dominates VMEM.
        row_cap = 1024 if cap > (96 << 20) else 512
        budget = max(vmem_limit // 3, 1 << 20)
        max_rows = max(8, (budget // (8 * max(Nc, 1))) // 8 * 8)
        tqd = _pick_tile(Nq, max(8, min(row_cap, max_rows)))
    assert Nq % tqd == 0

    return pl.pallas_call(
        _sqdist_kernel,
        out_shape=jax.ShapeDtypeStruct((B, Nq, Nc), jnp.float32),
        grid_spec=pltpu.PrefetchScalarGridSpec(
            num_scalar_prefetch=0, grid=(B, Nq // tqd),
            in_specs=[pl.BlockSpec((1, tqd, 3), lambda b, i: (b, i, 0)),
                      pl.BlockSpec((1, 3, Nc), lambda b, i: (b, 0, 0))],
            out_specs=pl.BlockSpec((1, tqd, Nc), lambda b, i: (b, i, 0))),
        compiler_params=pltpu.CompilerParams(
            dimension_semantics=("parallel", "parallel"),
            vmem_limit_bytes=vmem_limit),
    )(p_query, p_context_t)


# ----------------------------------------------------------------------------
# JAX glue: KNN selection + gather (knn_points / knn_gather semantics)
# ----------------------------------------------------------------------------
def build_radius_graph(p_query, p_context, h_context, sqdist, *,
                       radius, num_points, max_points):
    """Returns the concatenated [p_rel | h_group] slab (f32) and the masked squared
    distances of the first `num_points` neighbors."""
    B, Nq, _ = p_query.shape
    Nc = p_context.shape[1]
    K = num_points

    # TODO(synk): streaming a running-K-smallest selection into kernel 1 (Nc grid
    # axis + VMEM scratch) would avoid writing/re-reading the (B, Nq, Nc) matrix.
    # TODO(synk): lax.top_k tie-breaking may differ from pytorch3d knn_points when
    # distances tie exactly (benign for generic inputs).
    neg_d, idx = jax.lax.top_k(-sqdist, max_points)
    dist_k = -neg_d                                            # ascending squared dists
    knn_idx = jnp.where(dist_k > radius ** 2, Nc + 1, idx)     # out-of-radius sentinel
    rg_idx = knn_idx[:, :, :K]
    mask = rg_idx == Nc + 1
    rg_idx = jnp.where(mask, 0, rg_idx)
    d = jnp.where(mask, 0.0, dist_k[:, :, :K])                 # (B, Nq, K)

    # TODO(synk): this gather still materializes (B, Nq*K, 3+Hctx) in HBM; moving it
    # into the MLP kernel (scalar-prefetched rg_idx + in-VMEM gather / DMA gather)
    # would remove one HBM round trip of the largest intermediate.
    gather = jax.vmap(lambda x, i: x[i])                       # (N, D),(Nq, K)->(Nq, K, D)
    p_rel = gather(p_context, rg_idx) - p_query[:, :, None, :] # (B, Nq, K, 3)
    h_group = gather(h_context, rg_idx)                        # (B, Nq, K, Hctx)
    x = jnp.concatenate([p_rel, h_group], axis=-1)             # (B, Nq, K, 3+Hctx)
    x = x.reshape(B, Nq * K, x.shape[-1])
    return x, d


# ----------------------------------------------------------------------------
# Host-side folding: raise_xyz -> conv1, BN -> adjacent conv, conv3 -> g1, bf16.
# ----------------------------------------------------------------------------
def fold_params(params):
    """Fold eval-mode BN into adjacent convs, raise_xyz into conv1 and conv3(+BN3)
    into g1(+BNg1).  Returns 11 operands: 5 bf16 weight matrices and 6 f32 biases."""
    def bn_fold(w, b, s, t):
        return w * s[None, :], b * s + t

    # raise_xyz (Linear 3->64) folded into conv1 (no nonlinearity between), then BN1.
    w1 = jnp.concatenate([params["wr"] @ params["w1a"], params["w1b"]], axis=0)
    b1 = params["br"] @ params["w1a"] + params["b1"]
    w1, b1 = bn_fold(w1, b1, params["s1"], params["t1"])
    w2, b2 = bn_fold(params["w2"], params["b2"], params["s2"], params["t2"])
    w3, b3 = bn_fold(params["w3"], params["b3"], params["s3"], params["t3"])
    g1, gb1 = bn_fold(params["g1"], params["gb1"], params["gs1"], params["gt1"])
    g2, gb2 = bn_fold(params["g2"], params["gb2"], params["gs2"], params["gt2"])
    g3, gb3 = params["g3"], params["gb3"]

    # conv3(+BN3) -> g1(+BNg1) fold: the module has NO activation between the last
    # pointwise conv+BN and the first global conv, and the cosine weighting plus
    # K-sum are linear, so:
    #   relu(((sum_k c_k y_k) @ W3 + (sum_k c_k) b3) @ G1 + gb1)
    # = relu((sum_k c_k y_k) @ (W3 @ G1) + (sum_k c_k) * (b3 @ G1) + gb1)
    w3g1 = w3 @ g1            # (128, 128)
    b3g1 = b3 @ g1            # (128,)

    def W(w):
        return w.astype(jnp.bfloat16)

    def Bv(b):
        return b.reshape(1, -1).astype(jnp.float32)

    return [W(w1), Bv(b1), W(w2), Bv(b2), W(w3g1), Bv(b3g1), Bv(gb1),
            W(g2), Bv(gb2), W(g3), Bv(gb3)]


# ----------------------------------------------------------------------------
# Kernel 2: pointwise conv-MLP + cosine weighting + neighbor sum + global conv-MLP
#           for one (batch, query-tile).  All 1x1 convs are MXU matmuls.
# ----------------------------------------------------------------------------
def _vecfield_kernel(x_ref, dist_ref,
                     w1, b1, w2, b2, w3g1, b3g1, gb1, g2, gb2, g3, gb3,
                     o_ref, *, num_points, radius):
    f32, bf16 = jnp.float32, jnp.bfloat16
    K = num_points
    x = x_ref[0]                       # (TQ*K, 3+Hctx)  bf16
    dist = dist_ref[0]                 # (TQ, K)         f32 squared distances
    tq = dist.shape[0]

    # pointwise conv1 (raise_xyz + BN1 pre-folded) + ReLU
    y = jnp.dot(x, w1[...], preferred_element_type=f32) + b1[...]
    y = jnp.maximum(y, 0.0)
    # pointwise conv2 (+BN2) + ReLU
    y = jnp.dot(y.astype(bf16), w2[...], preferred_element_type=f32) + b2[...]
    y = jnp.maximum(y, 0.0)                                        # (TQ*K, 128)

    # cosine radius weighting.  `dist` is the SQUARED distance and is compared with
    # the un-squared radius — exactly as in the PyTorch module.
    c = 0.5 * (jnp.cos(dist * (np.pi / radius)) + 1.0)
    c = c * ((dist <= radius) & (dist > 0.0)).astype(f32)          # (TQ, K)
    csum = jnp.sum(c, axis=1, keepdims=True)                       # (TQ, 1)

    # Weighted neighbor sum hoisted in front of the (folded) conv3->g1 matmul:
    #   sum_k c_k*(y2_k @ W3 + b3) == (sum_k c_k*y2_k) @ W3 + (sum_k c_k)*b3
    yw = jnp.sum(y.reshape(tq, K, y.shape[-1]) * c[:, :, None], axis=1)   # (TQ, 128)

    # conv3(+BN3) folded into g1(+BNg1): single 128->128 matmul on TQ rows + ReLU
    y = (jnp.dot(yw.astype(bf16), w3g1[...], preferred_element_type=f32)
         + csum * b3g1[...] + gb1[...])
    y = jnp.maximum(y, 0.0)

    # remaining global conv-MLP tail (Conv1d k=1 == matmul)
    y = jnp.maximum(jnp.dot(y.astype(bf16), g2[...], preferred_element_type=f32)
                    + gb2[...], 0.0)
    y = jnp.dot(y.astype(bf16), g3[...], preferred_element_type=f32) + gb3[...]

    # TODO(synk): a lane-dense output layout ((B, 3, Nq) with tq % 128 == 0) would
    # avoid the masked 3-lane store; store volume is tiny, so left as follow-up.
    o_ref[0] = y.astype(o_ref.dtype)                               # (TQ, 3)


# ----------------------------------------------------------------------------
# Wrapper
# ----------------------------------------------------------------------------
def radius_vector_field_forward(p_query, p_context, h_context, params, *,
                                radius, num_points, max_points, tq=None):
    B, Nq, _ = p_query.shape
    K = num_points

    # Pallas kernel 1: pairwise squared distances (tiled over Nq).
    sqdist = pairwise_sqdist(p_query, p_context)

    # TODO(synk): top-K selection + index gather (pytorch3d knn_points / knn_gather)
    # stay in XLA; see build_radius_graph for the in-kernel-gather follow-up.
    x_slab, d = build_radius_graph(p_query, p_context, h_context, sqdist,
                                   radius=radius, num_points=num_points,
                                   max_points=max_points)
    x_slab = x_slab.astype(jnp.bfloat16)      # bf16 matmul operand, halves HBM traffic
    cin = x_slab.shape[-1]

    flat_params = fold_params(params)

    cap = _vmem_capacity_bytes()
    vmem_limit = _vmem_limit_bytes()
    if tq is None:
        # Keep the MXU fed: ~8K rows/tile on 64 MiB-VMEM parts (v7x), ~16K on
        # 128 MiB parts (v5e/v6e); per-tile working set stays well under budget.
        row_target = 16384 if cap > (96 << 20) else 8192
        tq = _pick_tile(Nq, max(8, row_target // K))
    # Megacore guard (v7x): keep >= 2 grid steps when B == 1 so both TCs get work.
    if B == 1 and Nq // tq < 2 and Nq > 8:
        tq = _pick_tile(Nq, max(8, Nq // 2))
    assert Nq % tq == 0
    assert tq % 8 == 0 or tq == Nq                    # (8,128) block constraint
    assert (tq * K) % 16 == 0 or tq == Nq             # bf16 sublane packing

    def wspec(w):
        zeros = (0,) * w.ndim
        return pl.BlockSpec(w.shape, lambda b, i, z=zeros: z)     # resident weights

    kern = functools.partial(_vecfield_kernel, num_points=K, radius=radius)
    out = pl.pallas_call(
        kern,
        out_shape=jax.ShapeDtypeStruct((B, Nq, 3), jnp.float32),
        grid_spec=pltpu.PrefetchScalarGridSpec(
            num_scalar_prefetch=0, grid=(B, Nq // tq),
            in_specs=[pl.BlockSpec((1, tq * K, cin), lambda b, i: (b, i, 0)),
                      pl.BlockSpec((1, tq, K), lambda b, i: (b, i, 0))]
                     + [wspec(w) for w in flat_params],
            out_specs=pl.BlockSpec((1, tq, 3), lambda b, i: (b, i, 0))),
        compiler_params=pltpu.CompilerParams(
            dimension_semantics=("parallel", "parallel"),
            vmem_limit_bytes=vmem_limit),
    )(x_slab, d, *flat_params)
    return out


# ----------------------------------------------------------------------------
# Deterministic parameter init (synthetic; matches the module's shapes)
# ----------------------------------------------------------------------------
def init_params(key, ctx_dim, raise_ch=64, hp=(128, 128, 256), hg=(128, 64),
                point_dim=3, eps=1e-5):
    def dense(k, fan_in, fan_out):
        k1, k2 = jax.random.split(k)
        w = jax.random.normal(k1, (fan_in, fan_out), jnp.float32) / np.sqrt(fan_in)
        b = 0.01 * jax.random.normal(k2, (fan_out,), jnp.float32)
        return w, b

    def bn(k, ch):
        k1, k2, k3, k4 = jax.random.split(k, 4)
        gamma = 1.0 + 0.1 * jax.random.normal(k1, (ch,), jnp.float32)
        beta = 0.1 * jax.random.normal(k2, (ch,), jnp.float32)
        mean = 0.1 * jax.random.normal(k3, (ch,), jnp.float32)
        var = jnp.abs(1.0 + 0.1 * jax.random.normal(k4, (ch,), jnp.float32))
        scale = gamma * jax.lax.rsqrt(var + eps)   # eval-mode BN as scale/shift
        shift = beta - mean * scale
        return scale, shift

    keys = jax.random.split(key, 12)
    p = {}
    p["wr"], p["br"] = dense(keys[0], 3, raise_ch)                 # Linear(3, raise_ch)
    c_in = raise_ch + ctx_dim
    w1, p["b1"] = dense(keys[1], c_in, hp[0])                      # Conv2d 1x1
    p["w1a"], p["w1b"] = w1[:raise_ch], w1[raise_ch:]
    p["s1"], p["t1"] = bn(keys[2], hp[0])
    p["w2"], p["b2"] = dense(keys[3], hp[0], hp[1])
    p["s2"], p["t2"] = bn(keys[4], hp[1])
    p["w3"], p["b3"] = dense(keys[5], hp[1], hp[2])
    p["s3"], p["t3"] = bn(keys[6], hp[2])
    p["g1"], p["gb1"] = dense(keys[7], hp[2], hg[0])               # Conv1d k=1
    p["gs1"], p["gt1"] = bn(keys[8], hg[0])
    p["g2"], p["gb2"] = dense(keys[9], hg[0], hg[1])
    p["gs2"], p["gt2"] = bn(keys[10], hg[1])
    p["g3"], p["gb3"] = dense(keys[11], hg[1], point_dim)
    return p


# ----------------------------------------------------------------------------
# Pure-JAX reference of the post-gather MLP path (module op order, f32, unfolded)
# ----------------------------------------------------------------------------
def reference_mlp(x_slab, d, params, *, radius, num_points):
    B, NqK, cin = x_slab.shape
    K = num_points
    Nq = NqK // K
    x = x_slab.reshape(B, Nq, K, cin)
    p_rel, h_grp = x[..., :3], x[..., 3:]
    h_rel = p_rel @ params["wr"] + params["br"]
    h = jnp.concatenate([h_rel, h_grp], axis=-1)
    w1 = jnp.concatenate([params["w1a"], params["w1b"]], axis=0)
    y = jnp.maximum((h @ w1 + params["b1"]) * params["s1"] + params["t1"], 0.0)
    y = jnp.maximum((y @ params["w2"] + params["b2"]) * params["s2"] + params["t2"], 0.0)
    y = (y @ params["w3"] + params["b3"]) * params["s3"] + params["t3"]
    c = 0.5 * (jnp.cos(d * np.pi / radius) + 1.0)
    c = c * ((d <= radius) & (d > 0.0)).astype(jnp.float32)
    y = jnp.sum(y * c[..., None], axis=2)                          # (B, Nq, 256)
    y = jnp.maximum((y @ params["g1"] + params["gb1"]) * params["gs1"] + params["gt1"], 0.0)
    y = jnp.maximum((y @ params["g2"] + params["gb2"]) * params["gs2"] + params["gt2"], 0.0)
    return y @ params["g3"] + params["gb3"]


if __name__ == "__main__":
    key = jax.random.PRNGKey(0)
    kq, kc, kh, kp = jax.random.split(key, 4)

    B, Nq, Nc, Hctx = 2, 16, 32, 8
    radius, num_points, max_points = 0.75, 8, 16

    p_query = 0.5 * jax.random.normal(kq, (B, Nq, 3), jnp.float32)
    p_context = 0.5 * jax.random.normal(kc, (B, Nc, 3), jnp.float32)
    h_context = jax.random.normal(kh, (B, Nc, Hctx), jnp.float32)
    params = init_params(kp, ctx_dim=Hctx)

    out = radius_vector_field_forward(
        p_query, p_context, h_context, params,
        radius=radius, num_points=num_points, max_points=max_points)
    out = jax.block_until_ready(out)

    assert out.shape == (B, Nq, 3), out.shape
    assert bool(jnp.all(jnp.isfinite(out)))

    # Correctness check of the folded/hoisted bf16 kernel against an f32 reference
    # that follows the module's original (unfolded) op order on the same radius graph.
    sqdist = pairwise_sqdist(p_query, p_context)
    x_slab, d = build_radius_graph(p_query, p_context, h_context, sqdist,
                                   radius=radius, num_points=num_points,
                                   max_points=max_points)
    ref = reference_mlp(x_slab, d, params, radius=radius, num_points=num_points)
    err = float(jnp.max(jnp.abs(out - ref)))
    assert err < 1e-1, f"max abs err vs reference = {err}"

    print("KERNEL_OK")
</pallas_src>

<mosaic_0001>
module attributes {stable_mosaic.version = 11 : i64} {
  func.func @_sqdist_kernel(%arg0: i32, %arg1: i32, %arg2: memref<1x16x3xf32, #tpu.memory_space<vmem>>, %arg3: memref<1x3x32xf32, #tpu.memory_space<vmem>>, %arg4: memref<1x16x32xf32, #tpu.memory_space<vmem>>) attributes {dimension_semantics = [#tpu.dimension_semantics<parallel>, #tpu.dimension_semantics<parallel>], iteration_bounds = array<i64: 2, 1>, scalar_prefetch = 0 : i64, scratch_operands = 0 : i64, tpu.core_type = #tpu.core_type<tc>, window_params = [{transform_indices = @transform_0, window_bounds = array<i64: 1, 16, 3>}, {transform_indices = @transform_1, window_bounds = array<i64: 1, 3, 32>}, {transform_indices = @transform_2, window_bounds = array<i64: 1, 16, 32>}]} {
    %c0 = arith.constant 0 : index
    %c0_0 = arith.constant 0 : index
    %c0_1 = arith.constant 0 : index
    %0 = vector.load %arg2[%c0, %c0_0, %c0_1] : memref<1x16x3xf32, #tpu.memory_space<vmem>>, vector<1x16x3xf32>
    %1 = vector.shape_cast %0 : vector<1x16x3xf32> to vector<16x3xf32>
    %c0_2 = arith.constant 0 : index
    %c0_3 = arith.constant 0 : index
    %c0_4 = arith.constant 0 : index
    %2 = vector.load %arg3[%c0_2, %c0_3, %c0_4] : memref<1x3x32xf32, #tpu.memory_space<vmem>>, vector<1x3x32xf32>
    %3 = vector.shape_cast %2 : vector<1x3x32xf32> to vector<3x32xf32>
    %4 = vector.extract_strided_slice %1 {offsets = [0, 0], sizes = [16, 1], strides = [1, 1]} : vector<16x3xf32> to vector<16x1xf32>
    %5 = vector.extract_strided_slice %3 {offsets = [0, 0], sizes = [1, 32], strides = [1, 1]} : vector<3x32xf32> to vector<1x32xf32>
    %6 = vector.broadcast %4 : vector<16x1xf32> to vector<16x32xf32>
    %7 = vector.broadcast %5 : vector<1x32xf32> to vector<16x32xf32>
    %8 = arith.subf %6, %7 : vector<16x32xf32>
    %9 = arith.mulf %8, %8 : vector<16x32xf32>
    %10 = vector.extract_strided_slice %1 {offsets = [0, 1], sizes = [16, 1], strides = [1, 1]} : vector<16x3xf32> to vector<16x1xf32>
    %11 = vector.extract_strided_slice %3 {offsets = [1, 0], sizes = [1, 32], strides = [1, 1]} : vector<3x32xf32> to vector<1x32xf32>
    %12 = vector.broadcast %10 : vector<16x1xf32> to vector<16x32xf32>
    %13 = vector.broadcast %11 : vector<1x32xf32> to vector<16x32xf32>
    %14 = arith.subf %12, %13 : vector<16x32xf32>
    %15 = arith.mulf %14, %14 : vector<16x32xf32>
    %16 = arith.addf %9, %15 : vector<16x32xf32>
    %17 = vector.extract_strided_slice %1 {offsets = [0, 2], sizes = [16, 1], strides = [1, 1]} : vector<16x3xf32> to vector<16x1xf32>
    %18 = vector.extract_strided_slice %3 {offsets = [2, 0], sizes = [1, 32], strides = [1, 1]} : vector<3x32xf32> to vector<1x32xf32>
    %19 = vector.broadcast %17 : vector<16x1xf32> to vector<16x32xf32>
    %20 = vector.broadcast %18 : vector<1x32xf32> to vector<16x32xf32>
    %21 = arith.subf %19, %20 : vector<16x32xf32>
    %22 = arith.mulf %21, %21 : vector<16x32xf32>
    %23 = arith.addf %16, %22 : vector<16x32xf32>
    %c0_5 = arith.constant 0 : index
    %c0_6 = arith.constant 0 : index
    %c0_7 = arith.constant 0 : index
    %24 = vector.load %arg4[%c0_5, %c0_6, %c0_7] : memref<1x16x32xf32, #tpu.memory_space<vmem>>, vector<1x16x32xf32>
    %25 = vector.shape_cast %24 : vector<1x16x32xf32> to vector<16x32xf32>
    %26 = vector.shape_cast %23 : vector<16x32xf32> to vector<1x16x32xf32>
    tpu.vector_store %arg4[%c0_5, %c0_6, %c0_7], %26 {strides = array<i32>} : memref<1x16x32xf32, #tpu.memory_space<vmem>>, vector<1x16x32xf32>,
    return
  }
  func.func @transform_0(%arg0: i32, %arg1: i32) -> (i32, i32, i32) {
    %c0_i32 = arith.constant 0 : i32
    %c0_i32_0 = arith.constant 0 : i32
    return %arg0, %arg1, %c0_i32 : i32, i32, i32
  }
  func.func @transform_1(%arg0: i32, %arg1: i32) -> (i32, i32, i32) {
    %c0_i32 = arith.constant 0 : i32
    %c0_i32_0 = arith.constant 0 : i32
    %c0_i32_1 = arith.constant 0 : i32
    return %arg0, %c0_i32, %c0_i32_0 : i32, i32, i32
  }
  func.func @transform_2(%arg0: i32, %arg1: i32) -> (i32, i32, i32) {
    %c0_i32 = arith.constant 0 : i32
    %c0_i32_0 = arith.constant 0 : i32
    return %arg0, %arg1, %c0_i32 : i32, i32, i32
  }
}

</mosaic_0001>

<llo_original>
// kernel: tpu_custom_call.1
$region0: #{tpu_custom_call.1}
  #allocation0 [shape = 'u32[]', space=smem, size = 0x4, offset = 0x4, fixed_abs, tag = 'smem constant byte address 0x4 - core index']
  #allocation1 [shape = 'u32[144,128]{1,0:T(1,128)}', space=vmem, size = 0x12000, scoped, tag = 'internal scratch']
  %s0 = inlined_call_operand.vmem [shape: f32[2,16,3], index: 0, kind: input, shape index: {}]
  %s1 = inlined_call_operand.vmem [shape: f32[2,3,32], index: 1, kind: input, shape index: {}]
  %s2 = inlined_call_operand.hbm [shape: f32[2,16,32], index: 2, kind: output, shape index: {}]
  %s3 = sld [smem:[#allocation0]]
  $region41: #{tpu_custom_call.1} parent=0
    _
  %s5 = ssub.s32 1, %s3
  %s6 = scalar_select 0, %s5, %s3
  $region1: #{tpu_custom_call.1} parent=0
    #allocation2 [shape = 'u8[16384]{0}', space=vmem, size = 0x4000, scoped, tag = 'output window, operand 0']
    #allocation3 [shape = 's32[2]{0}', space=sflag, size = 0x8, scoped, tag = 'scoped memory for tpu_custom_call.1']
    %7 = vsyncpa [#allocation3], 0
    %s8 = scalar_lea.sflag [#allocation3], 1
    %9 = vsyncpa %s8, 0
    loop: start=0, step=1, limit=4
    $region2: #{tpu_custom_call.1} parent=1 // loop_pre_header
      _
    $region3: #{tpu_custom_call.1} parent=1 // loop_header
      %s11 = sphi 0, %s15
      %p12 = scmp.ge.s32.totalorder %s11, 4
      %s18 = sphi 0, %s30
      %s19 = sphi 0, %s26
      %s20 = sphi 0, %s18
      %s21 = sphi 0, %s19
      %s22 = sphi 0, %s20
      %s23 = sphi 0, %s21
      %s35 = sphi 0, %s37
      %s38 = sphi 0, %s35
      %s39 = sphi 0, %s38
      %s55 = sphi 0, %s39
      %s61 = sphi 0, %s63
      %s64 = sphi 0, %s61
      %s65 = sphi 0, %s64
      %s81 = sphi 0, %s65
      %s89 = sphi 0, %s91
      %s92 = sphi 0, %s89
      %s93 = sphi 0, %s92
      %s109 = sphi 0, %s93
    $region4: #{tpu_custom_call.1} parent=1 // loop_header_branch
      %14 = sbr.rel (%p12) target = $region8
    $region5: #{tpu_custom_call.1} parent=1 // loop_body
      %s16 = ssub.s32 %s11, 1
      %s17 = ssub.s32 %s11, 2
      %s24 = sadd.s32 1, %s19
      %p25 = scmp.ge.s32.totalorder %s24, 1
      %s26 = scalar_select %p25, 0, %s24
      %s27 = sadd.s32 1, %s18
      %s28 = scalar_select %p25, %s27, %s18
      %p29 = scmp.ge.s32.totalorder %s28, 2
      %s30 = scalar_select %p29, 0, %s28
      %s31 = ssub.s32 %s18, %s30
      %s32 = ssub.s32 %s19, %s26
      %s33 = sor.u32 %s31, %s32
      %p34 = scmp.eq.s32.totalorder %s33, 0
      %s36 = sadd.s32 %s35, 1
      %s37 = scalar_select %p34, %s35, %s36
      %p40 = pneg %p34
      %p41 = scmp.eq.s32.totalorder %s11, 1
      %p42 = por %p40, %p41
      %p43 = scmp.ne.s32.totalorder %s35, %s38
      %p44 = scmp.eq.s32.totalorder %s11, 0
      %p45 = por %p43, %p44
      %p46 = scmp.ne.s32.totalorder %s35, %s38
      %p47 = scmp.eq.s32.totalorder %s16, 1
      %p48 = por %p46, %p47
      %p49 = scmp.ne.s32.totalorder %s38, %s39
      %p50 = scmp.eq.s32.totalorder %s16, 0
      %p51 = por %p49, %p50
      %p52 = scmp.ne.s32.totalorder %s38, %s39
      %p53 = scmp.eq.s32.totalorder %s17, 1
      %p54 = por %p52, %p53
      %p56 = scmp.ne.s32.totalorder %s39, %s55
      %p57 = scmp.eq.s32.totalorder %s17, 0
      %p58 = por %p56, %p57
      %s59 = ssub.s32 %s18, %s30
      %p60 = scmp.eq.s32.totalorder %s59, 0
      %s62 = sadd.s32 %s61, 1
      %s63 = scalar_select %p60, %s61, %s62
      %p66 = pneg %p60
      %p67 = scmp.eq.s32.totalorder %s11, 1
      %p68 = por %p66, %p67
      %p69 = scmp.ne.s32.totalorder %s61, %s64
      %p70 = scmp.eq.s32.totalorder %s11, 0
      %p71 = por %p69, %p70
      %p72 = scmp.ne.s32.totalorder %s61, %s64
      %p73 = scmp.eq.s32.totalorder %s16, 1
      %p74 = por %p72, %p73
      %p75 = scmp.ne.s32.totalorder %s64, %s65
      %p76 = scmp.eq.s32.totalorder %s16, 0
      %p77 = por %p75, %p76
      %p78 = scmp.ne.s32.totalorder %s64, %s65
      %p79 = scmp.eq.s32.totalorder %s17, 1
      %p80 = por %p78, %p79
      %p82 = scmp.ne.s32.totalorder %s65, %s81
      %p83 = scmp.eq.s32.totalorder %s17, 0
      %p84 = por %p82, %p83
      %s85 = ssub.s32 %s18, %s30
      %s86 = ssub.s32 %s19, %s26
      %s87 = sor.u32 %s85, %s86
      %p88 = scmp.eq.s32.totalorder %s87, 0
      %s90 = sadd.s32 %s89, 1
      %s91 = scalar_select %p88, %s89, %s90
      %p94 = pneg %p88
      %p95 = scmp.eq.s32.totalorder %s11, 1
      %p96 = por %p94, %p95
      %p97 = scmp.ne.s32.totalorder %s89, %s92
      %p98 = scmp.eq.s32.totalorder %s11, 0
      %p99 = por %p97, %p98
      %p100 = scmp.ne.s32.totalorder %s89, %s92
      %p101 = scmp.eq.s32.totalorder %s16, 1
      %p102 = por %p100, %p101
      %p103 = scmp.ne.s32.totalorder %s92, %s93
      %p104 = scmp.eq.s32.totalorder %s16, 0
      %p105 = por %p103, %p104
      %p106 = scmp.ne.s32.totalorder %s92, %s93
      %p107 = scmp.eq.s32.totalorder %s17, 1
      %p108 = por %p106, %p107
      %p110 = scmp.ne.s32.totalorder %s93, %s109
      %p111 = scmp.eq.s32.totalorder %s17, 0
      %p112 = por %p110, %p111
      %p113 = scmp.le.s32.totalorder 1, %s11
      %p114 = scmp.lt.s32.totalorder %s11, 3
      %p115 = pnand %p113, %p114
      %p116 = pneg %p115
      // Predicated region
      $region9: #{tpu_custom_call.1} parent=5 // pred_check
        _
      $region10: #{tpu_custom_call.1} parent=5 // pred_check_branch
        %118 = sbr.rel (%p115) target = $region12
      $region11: #{tpu_custom_call.1} parent=5 // pred_region
        %s119 = ssub.s32 %s11, 1
      $region12: #{tpu_custom_call.1} parent=5 // pred_fallthru
        _
      %p120 = scmp.lt.s32.totalorder %s11, 2
      // Predicated region
      $region13: #{tpu_custom_call.1} parent=5 // pred_check
        %p121 = pneg %p120
      $region14: #{tpu_custom_call.1} parent=5 // pred_check_branch
        %123 = sbr.rel (%p121) target = $region16
      $region15: #{tpu_custom_call.1} parent=5 // pred_region
        // Predicated region
        $region17: #{tpu_custom_call.1} parent=15 // pred_check
          %p124 = pneg %p45
        $region18: #{tpu_custom_call.1} parent=15 // pred_check_branch
          %126 = sbr.rel (%p124) target = $region20
        $region19: #{tpu_custom_call.1} parent=15 // pred_region
          %s127 = smul.u32 2, %s19
          %p128 = scmp.lt.s32.totalorder %s18, 1
          %s129 = scalar_select %p128, %s18, 1
          %p130 = scmp.lt.s32.totalorder %s127, 1
          %s131 = scalar_select %p130, %s127, 1
          %s132 = smul.addr %s129, 2
          %s133 = sadd.s32 %s131, %s132
          %s134 = smul.addr %s133, 8
          %s135 = scalar_lea.vmem %s0, %s134
          %s136 = smul.u32 2, %s19
        $region20: #{tpu_custom_call.1} parent=15 // pred_fallthru
          _
        // Predicated region
        $region21: #{tpu_custom_call.1} parent=15 // pred_check
          %p137 = pneg %p71
        $region22: #{tpu_custom_call.1} parent=15 // pred_check_branch
          %139 = sbr.rel (%p137) target = $region24
        $region23: #{tpu_custom_call.1} parent=15 // pred_region
          %p140 = scmp.lt.s32.totalorder %s18, 1
          %s141 = scalar_select %p140, %s18, 1
          %s142 = smul.addr %s141, 4
          %s143 = scalar_lea.vmem %s1, %s142
        $region24: #{tpu_custom_call.1} parent=15 // pred_fallthru
          _
      $region16: #{tpu_custom_call.1} parent=5 // pred_fallthru
        _
      %p144 = scmp.le.s32.totalorder 1, %s11
      %p145 = scmp.lt.s32.totalorder %s11, 3
      %p146 = pnand %p144, %p145
      %p147 = pneg %p146
      // Predicated region
      $region25: #{tpu_custom_call.1} parent=5 // pred_check
        _
      $region26: #{tpu_custom_call.1} parent=5 // pred_check_branch
        %149 = sbr.rel (%p146) target = $region28
      $region27: #{tpu_custom_call.1} parent=5 // pred_region
        %s150 = ssub.s32 %s11, 1
        %s151 = smul.u32 2, %s21
        %p152 = scmp.lt.s32.totalorder %s20, 1
        %s153 = scalar_select %p152, %s20, 1
        %p154 = scmp.lt.s32.totalorder %s151, 1
        %s155 = scalar_select %p154, %s151, 1
        %s156 = smul.addr %s153, 2
        %s157 = sadd.s32 %s155, %s156
        %s158 = smul.addr %s157, 8
        %s159 = scalar_lea.vmem %s0, %s158
        %p160 = pneg %p51
        %p161 = pneg %p48
        %p162 = scmp.lt.s32.totalorder %s20, 1
        %s163 = scalar_select %p162, %s20, 1
        %s164 = smul.addr %s163, 4
        %s165 = scalar_lea.vmem %s1, %s164
        %p166 = pneg %p77
        %p167 = pneg %p74
        %p168 = pneg %p105
        %p169 = pneg %p102
        %s170 = sand.u32 %s92, 1
        %s171 = scalar_lea.sflag [#allocation3], %s170
        %s172 = sand.u32 %s92, 1
        %s173 = smul.addr %s172, 16
        %s174 = scalar_lea.vmem [#allocation2], %s173
        %s175 = smul.u32 2, %s21
        %p176 = scmp.lt.s32.totalorder %s20, 1
        %s177 = scalar_select %p176, %s20, 1
        %p178 = scmp.lt.s32.totalorder %s175, 1
        %s179 = scalar_select %p178, %s175, 1
        %s180 = smul.addr %s177, 2
        %s181 = sadd.s32 %s179, %s180
        %s182 = smul.addr %s181, 8
        %s183 = scalar_lea.vmem %s0, %s182
        %s184 = smul.u32 2, %s21
        %p185 = scmp.lt.s32.totalorder %s20, 1
        %s186 = scalar_select %p185, %s20, 1
        %s187 = smul.addr %s186, 4
        %s188 = scalar_lea.vmem %s1, %s187
        %s189 = smul.u32 2, %s21
        %v190 = vld [vmem:[%s183] sm:$0xff]
        %v191 = vld [vmem:[%s183 + $0x8] sm:$0xff]
        %v192 = vld [vmem:[%s188] sm:$0x7]
        %194 = vset.pattern.permute.xlu0 0
        %195 = vperm.xlu0 %194, %v190
        %v196 = vpop.permute.xlu0 %195
        %199 = vset.pattern.permute.xlu0 0
        %200 = vperm.xlu0 %199, %v191
        %v201 = vpop.permute.xlu0 %200
        %v203 = vlaneseq
        %v204 = vshrl.u32 %v203, 7
        %v205 = vsub.s32 0, %v204
        %v206 = vrot.slane %v192, %v205
        %v207 = vsub.f32 %v196, %v206
        %v208 = vsub.f32 %v201, %v206
        %v209 = vmul.f32 %v207, %v207
        %v210 = vmul.f32 %v208, %v208
        %211 = vset.pattern.permute.xlu0 1
        %212 = vperm.xlu0 %211, %v190
        %v213 = vpop.permute.xlu0 %212
        %215 = vset.pattern.permute.xlu0 1
        %216 = vperm.xlu0 %215, %v191
        %v217 = vpop.permute.xlu0 %216
        %v219 = vlaneseq
        %v220 = vshrl.u32 %v219, 7
        %v221 = vsub.s32 1, %v220
        %v222 = vrot.slane %v192, %v221
        %v223 = vsub.f32 %v213, %v222
        %v224 = vsub.f32 %v217, %v222
        %v225 = vmul.f32 %v223, %v223
        %v226 = vmul.f32 %v224, %v224
        %v227 = vadd.f32 %v209, %v225
        %v228 = vadd.f32 %v210, %v226
        %229 = vset.pattern.permute.xlu0 2
        %230 = vperm.xlu0 %229, %v190
        %v231 = vpop.permute.xlu0 %230
        %233 = vset.pattern.permute.xlu0 2
        %234 = vperm.xlu0 %233, %v191
        %v235 = vpop.permute.xlu0 %234
        %v237 = vlaneseq
        %v238 = vshrl.u32 %v237, 7
        %v239 = vsub.s32 2, %v238
        %v240 = vrot.slane %v192, %v239
        %v241 = vsub.f32 %v231, %v240
        %v242 = vsub.f32 %v235, %v240
        %v243 = vmul.f32 %v241, %v241
        %v244 = vmul.f32 %v242, %v242
        %v245 = vadd.f32 %v227, %v243
        %v246 = vadd.f32 %v228, %v244
        %vm247 = vcmask 261120
        %248 = vst.msk [vmem:[%s174] sm:$0xff] %vm247, %v245
        %249 = vst.msk [vmem:[%s174 + $0x8] sm:$0xff] %vm247, %v246
        %s250 = sand.u32 %s92, 1
        %s251 = scalar_lea.sflag [#allocation3], %s250
        %s252 = sand.u32 %s92, 1
        %s253 = smul.addr %s252, 16
        %s254 = scalar_lea.vmem [#allocation2], %s253
        // Predicated region
        $region29: #{tpu_custom_call.1} parent=27 // pred_check
          %p255 = pneg %p102
        $region30: #{tpu_custom_call.1} parent=27 // pred_check_branch
          %257 = sbr.rel (%p255) target = $region32
        $region31: #{tpu_custom_call.1} parent=27 // pred_region
          %s258 = smul.u32 2, %s21
          %s260 = ssub.s32 256, 256
          %261 = vsyncadd %s251, %s260
          %s262 = smul.addr %s20, 2
          %s263 = sadd.s32 %s258, %s262
          %s264 = smul.addr %s263, 128
          %s265 = scalar_lea.hbm %s2, %s264
          %s266 = sshll.u32 %s254, 4
          %s267 = int_to_ptr.vmem [resolvable:$true] %s266
          %272 = dma.vmem_to_hbm [thread:$0]  %s267, 256, %s265, %s251, 128, 128, 8
        $region32: #{tpu_custom_call.1} parent=27 // pred_fallthru
          _
      $region28: #{tpu_custom_call.1} parent=5 // pred_fallthru
        _
      %p273 = scmp.le.s32.totalorder 2, %s11
      // Predicated region
      $region33: #{tpu_custom_call.1} parent=5 // pred_check
        %p274 = pneg %p273
      $region34: #{tpu_custom_call.1} parent=5 // pred_check_branch
        %276 = sbr.rel (%p274) target = $region36
      $region35: #{tpu_custom_call.1} parent=5 // pred_region
        %s277 = ssub.s32 %s11, 2
        // Predicated region
        $region37: #{tpu_custom_call.1} parent=35 // pred_check
          %p278 = pneg %p108
        $region38: #{tpu_custom_call.1} parent=35 // pred_check_branch
          %280 = sbr.rel (%p278) target = $region40
        $region39: #{tpu_custom_call.1} parent=35 // pred_region
          %s281 = sand.u32 %s93, 1
          %s282 = scalar_lea.sflag [#allocation3], %s281
          %s283 = sand.u32 %s93, 1
          %s284 = smul.addr %s283, 16
          %s285 = scalar_lea.vmem [#allocation2], %s284
          %286 = dma.done %s282, 256
        $region40: #{tpu_custom_call.1} parent=35 // pred_fallthru
          _
      $region36: #{tpu_custom_call.1} parent=5 // pred_fallthru
        _
    $region6: #{tpu_custom_call.1} parent=1 // loop_footer
      %s15 = sadd.s32 1, %s11
    $region7: #{tpu_custom_call.1} parent=1 // loop_footer_branch
      %10 = sbr.rel target = $region3
    $region8: #{tpu_custom_call.1} parent=1 // loop_exit
      _
    %287 = vsyncpa [#allocation3], 1
    %s288 = scalar_lea.sflag [#allocation3], 1
    %289 = vsyncpa %s288, 1

</llo_original>
